<compile_context>
chip_gen: v7x
topology: tpu7x:2x2x1
jax: 0.10.0
libtpu: 0.0.40
codegen_flags: <defaults>
</compile_context>

<pallas_src>
import functools
import math

import jax
import jax.numpy as jnp
from jax.experimental import pallas as pl
from jax.experimental.pallas import tpu as pltpu


def fast_attention_kernel(x_ref, wqkv_ref, gamma_ref, beta_ref, o_ref,
                          q_scr, k_scr, v_scr, *, eps, tq, d_model):
    """One (batch, q-tile) step.

    x_ref:     (1, N, D)  f32   full sequence for this batch element
    wqkv_ref:  (D, 3D)    bf16  [Wq*scale | Wk | Wv] already transposed to [in, out]
    gamma/beta:(1, D)     f32
    o_ref:     (1, tq, D) f32
    q/k/v_scr: (N, D)     bf16  projections, computed once per batch element
    """
    qi = pl.program_id(1)
    D = d_model

    # Compute the fused QKV projection for the whole sequence once per batch element.
    @pl.when(qi == 0)
    def _():
        x_all = x_ref[0].astype(jnp.bfloat16)                        # (N, D)
        qkv = jnp.dot(x_all, wqkv_ref[...],
                      preferred_element_type=jnp.float32)            # (N, 3D) f32 acc
        q_scr[...] = qkv[:, :D].astype(jnp.bfloat16)                 # already scaled
        k_scr[...] = qkv[:, D:2 * D].astype(jnp.bfloat16)
        v_scr[...] = qkv[:, 2 * D:].astype(jnp.bfloat16)

    row0 = pl.multiple_of(qi * tq, tq)
    q = q_scr[pl.ds(row0, tq), :]                                    # (tq, D) bf16
    k = k_scr[...]                                                   # (N, D)  bf16
    v = v_scr[...]                                                   # (N, D)  bf16

    # scores = q @ k^T without materializing a transpose (contract last dims on MXU).
    scores = jax.lax.dot_general(
        q, k, dimension_numbers=(((1,), (1,)), ((), ())),
        preferred_element_type=jnp.float32)                          # (tq, N) f32

    # Numerically stable softmax; normalization deferred past the context matmul.
    m = jnp.max(scores, axis=-1, keepdims=True)
    e = jnp.exp(scores - m)                                          # (tq, N) f32
    denom = jnp.sum(e, axis=-1, keepdims=True)                       # (tq, 1)

    # Dropout: identity in eval mode.

    ctx = jnp.dot(e.astype(jnp.bfloat16), v,
                  preferred_element_type=jnp.float32)                # (tq, D) f32
    ctx = ctx * pl.reciprocal(denom, approx=True)                    # rescale on (tq, D)

    # Residual + LayerNorm over d_model (f32).
    x_res = x_ref[0, pl.ds(row0, tq), :]                             # (tq, D) f32
    y = ctx + x_res
    mu = jnp.mean(y, axis=-1, keepdims=True)
    yc = y - mu
    var = jnp.mean(yc * yc, axis=-1, keepdims=True)
    out = yc * jax.lax.rsqrt(var + eps) * gamma_ref[...] + beta_ref[...]

    o_ref[0] = out.astype(o_ref.dtype)


def _pick_q_tile(n):
    """Largest convenient query tile that divides N; full N for small / odd sizes."""
    for t in (512, 256, 128):
        if n >= t and n % t == 0:
            return t
    return n


def fast_attention(x, wq, wk, wv, gamma, beta, *, eps=1e-5):
    """x: [B, N, D] f32; wq/wk/wv: [D, D] (PyTorch [out, in]); gamma/beta: [D]."""
    B, N, D = x.shape
    scale = 1.0 / math.sqrt(D)

    # Pre-transpose to [in, out], fold the score scale into Wq, fuse, cast to bf16.
    wqkv = jnp.concatenate([(wq * scale).T, wk.T, wv.T], axis=1).astype(jnp.bfloat16)
    gamma2 = gamma.reshape(1, D).astype(jnp.float32)
    beta2 = beta.reshape(1, D).astype(jnp.float32)

    tq = _pick_q_tile(N)
    num_q_tiles = N // tq

    kernel = functools.partial(fast_attention_kernel, eps=eps, tq=tq, d_model=D)

    # Rough VMEM budget: double-buffered x/out blocks + 2x bf16 Wqkv + bf16 QKV scratch
    # + (tq, N) score intermediates.  Keep >= 32 MiB (v5e default is only 16 MiB) and
    # cap at 56 MiB so the same configuration stays within v7x's 64 MiB VMEM.
    vmem_est = (2 * N * D * 4            # x blocks (double-buffered)
                + 2 * 3 * D * D * 2      # wqkv bf16 (double-buffered)
                + 4 * D * 4              # gamma / beta
                + 2 * tq * D * 4         # out blocks
                + 3 * N * D * 2          # q/k/v scratch (bf16)
                + 4 * tq * N * 4)        # score / exp intermediates
    vmem_limit = int(min(max(2 * vmem_est, 32 << 20), 56 << 20))

    return pl.pallas_call(
        kernel,
        out_shape=jax.ShapeDtypeStruct((B, N, D), x.dtype),
        grid_spec=pltpu.PrefetchScalarGridSpec(
            num_scalar_prefetch=0,
            grid=(B, num_q_tiles),
            in_specs=[
                pl.BlockSpec((1, N, D), lambda b, qi: (b, 0, 0)),      # x (full seq per b)
                pl.BlockSpec((D, 3 * D), lambda b, qi: (0, 0)),        # fused Wqkv (bf16)
                pl.BlockSpec((1, D), lambda b, qi: (0, 0)),            # gamma
                pl.BlockSpec((1, D), lambda b, qi: (0, 0)),            # beta
            ],
            out_specs=pl.BlockSpec((1, tq, D), lambda b, qi: (b, qi, 0)),
            scratch_shapes=[
                pltpu.VMEM((N, D), jnp.bfloat16),                      # Q (pre-scaled)
                pltpu.VMEM((N, D), jnp.bfloat16),                      # K
                pltpu.VMEM((N, D), jnp.bfloat16),                      # V
            ],
        ),
        compiler_params=pltpu.CompilerParams(
            dimension_semantics=("parallel", "arbitrary"),
            vmem_limit_bytes=vmem_limit,
        ),
    )(x, wqkv, gamma2, beta2)


def reference_fast_attention(x, wq, wk, wv, gamma, beta, eps=1e-5):
    """Pure-JAX f32 reference mirroring the PyTorch forward (eval mode)."""
    D = x.shape[-1]
    scale = 1.0 / math.sqrt(D)
    q = x @ wq.T
    k = x @ wk.T
    v = x @ wv.T
    scores = jnp.einsum("bnd,bmd->bnm", q, k) * scale
    attn = jax.nn.softmax(scores, axis=-1)
    context = jnp.einsum("bnm,bmd->bnd", attn, v)
    y = context + x
    mu = jnp.mean(y, axis=-1, keepdims=True)
    var = jnp.mean((y - mu) ** 2, axis=-1, keepdims=True)
    return (y - mu) / jnp.sqrt(var + eps) * gamma + beta


if __name__ == "__main__":
    B, N, D = 2, 8, 32   # batch, seq, d_model

    key = jax.random.PRNGKey(0)
    kx, kq, kk, kv = jax.random.split(key, 4)

    x = jax.random.normal(kx, (B, N, D), dtype=jnp.float32)

    # Shapes match nn.Linear(d_model, d_model, bias=False) and nn.LayerNorm(d_model).
    bound = 1.0 / math.sqrt(D)
    wq = jax.random.uniform(kq, (D, D), jnp.float32, -bound, bound)
    wk = jax.random.uniform(kk, (D, D), jnp.float32, -bound, bound)
    wv = jax.random.uniform(kv, (D, D), jnp.float32, -bound, bound)
    gamma = jnp.ones((D,), jnp.float32)
    beta = jnp.zeros((D,), jnp.float32)

    out = fast_attention(x, wq, wk, wv, gamma, beta)
    out = jax.block_until_ready(out)

    ref = reference_fast_attention(x, wq, wk, wv, gamma, beta)
    assert out.shape == (B, N, D)
    # bf16 MXU operands (f32 accumulation) -> tolerance loosened vs a pure-f32 kernel.
    max_err = jnp.max(jnp.abs(out - ref))
    assert jnp.allclose(out, ref, atol=3e-2, rtol=3e-2), f"max abs err = {max_err}"

    print("KERNEL_OK")
</pallas_src>

<mosaic_0001>
module attributes {stable_mosaic.version = 11 : i64} {
  func.func @fast_attention_kernel(%arg0: i32, %arg1: i32, %arg2: memref<1x8x32xf32, #tpu.memory_space<vmem>>, %arg3: memref<32x96xbf16, #tpu.memory_space<vmem>>, %arg4: memref<1x32xf32, #tpu.memory_space<vmem>>, %arg5: memref<1x32xf32, #tpu.memory_space<vmem>>, %arg6: memref<1x8x32xf32, #tpu.memory_space<vmem>>, %arg7: memref<8x32xbf16, #tpu.memory_space<vmem>>, %arg8: memref<8x32xbf16, #tpu.memory_space<vmem>>, %arg9: memref<8x32xbf16, #tpu.memory_space<vmem>>) attributes {dimension_semantics = [#tpu.dimension_semantics<parallel>, #tpu.dimension_semantics<arbitrary>], iteration_bounds = array<i64: 2, 1>, scalar_prefetch = 0 : i64, scratch_operands = 3 : i64, tpu.core_type = #tpu.core_type<tc>, window_params = [{transform_indices = @transform_0, window_bounds = array<i64: 1, 8, 32>}, {pipeline_mode = #tpu.pipeline_mode<synchronous>, transform_indices = @transform_1, window_bounds = array<i64: 32, 96>}, {pipeline_mode = #tpu.pipeline_mode<synchronous>, transform_indices = @transform_2, window_bounds = array<i64: 1, 32>}, {pipeline_mode = #tpu.pipeline_mode<synchronous>, transform_indices = @transform_3, window_bounds = array<i64: 1, 32>}, {transform_indices = @transform_4, window_bounds = array<i64: 1, 8, 32>}]} {
    %c0_i32 = arith.constant 0 : i32
    %0 = arith.cmpi eq, %arg1, %c0_i32 : i32
    %1 = arith.extui %0 : i1 to i32
    %c0_i32_0 = arith.constant 0 : i32
    %2 = arith.cmpi ne, %1, %c0_i32_0 : i32
    scf.if %2 {
      %c0_22 = arith.constant 0 : index
      %c0_23 = arith.constant 0 : index
      %c0_24 = arith.constant 0 : index
      %51 = vector.load %arg2[%c0_22, %c0_23, %c0_24] : memref<1x8x32xf32, #tpu.memory_space<vmem>>, vector<1x8x32xf32>
      %52 = vector.shape_cast %51 : vector<1x8x32xf32> to vector<8x32xf32>
      %53 = arith.truncf %52 : vector<8x32xf32> to vector<8x32xbf16>
      %c0_25 = arith.constant 0 : index
      %c0_26 = arith.constant 0 : index
      %54 = vector.load %arg3[%c0_25, %c0_26] : memref<32x96xbf16, #tpu.memory_space<vmem>>, vector<32x96xbf16>
      %cst_27 = arith.constant dense<0.000000e+00> : vector<8x96xf32>
      %55 = tpu.matmul %53, %54, %cst_27 {dimension_numbers = #tpu.dot_dimension_numbers<[1], [0], [0], [1], [0, 0, 1, 1], [], []>} : vector<8x32xbf16>, vector<32x96xbf16>, vector<8x96xf32> -> vector<8x96xf32>
      %56 = vector.extract_strided_slice %55 {offsets = [0, 0], sizes = [8, 32], strides = [1, 1]} : vector<8x96xf32> to vector<8x32xf32>
      %57 = arith.truncf %56 : vector<8x32xf32> to vector<8x32xbf16>
      %c0_28 = arith.constant 0 : index
      %c0_29 = arith.constant 0 : index
      %58 = vector.load %arg7[%c0_28, %c0_29] : memref<8x32xbf16, #tpu.memory_space<vmem>>, vector<8x32xbf16>
      tpu.vector_store %arg7[%c0_28, %c0_29], %57 {strides = array<i32>} : memref<8x32xbf16, #tpu.memory_space<vmem>>, vector<8x32xbf16>,
      %59 = vector.extract_strided_slice %55 {offsets = [0, 32], sizes = [8, 32], strides = [1, 1]} : vector<8x96xf32> to vector<8x32xf32>
      %60 = arith.truncf %59 : vector<8x32xf32> to vector<8x32xbf16>
      %c0_30 = arith.constant 0 : index
      %c0_31 = arith.constant 0 : index
      %61 = vector.load %arg8[%c0_30, %c0_31] : memref<8x32xbf16, #tpu.memory_space<vmem>>, vector<8x32xbf16>
      tpu.vector_store %arg8[%c0_30, %c0_31], %60 {strides = array<i32>} : memref<8x32xbf16, #tpu.memory_space<vmem>>, vector<8x32xbf16>,
      %62 = vector.extract_strided_slice %55 {offsets = [0, 64], sizes = [8, 32], strides = [1, 1]} : vector<8x96xf32> to vector<8x32xf32>
      %63 = arith.truncf %62 : vector<8x32xf32> to vector<8x32xbf16>
      %c0_32 = arith.constant 0 : index
      %c0_33 = arith.constant 0 : index
      %64 = vector.load %arg9[%c0_32, %c0_33] : memref<8x32xbf16, #tpu.memory_space<vmem>>, vector<8x32xbf16>
      tpu.vector_store %arg9[%c0_32, %c0_33], %63 {strides = array<i32>} : memref<8x32xbf16, #tpu.memory_space<vmem>>, vector<8x32xbf16>,
    } else {
    }
    %c8_i32 = arith.constant 8 : i32
    %3 = arith.muli %arg1, %c8_i32 : i32
    %4 = tpu.assume_multiple %3, 8 : i32
    %5 = arith.index_cast %4 : i32 to index
    %c0 = arith.constant 0 : index
    %6 = vector.load %arg7[%5, %c0] : memref<8x32xbf16, #tpu.memory_space<vmem>>, vector<8x32xbf16>
    %c0_1 = arith.constant 0 : index
    %c0_2 = arith.constant 0 : index
    %7 = vector.load %arg8[%c0_1, %c0_2] : memref<8x32xbf16, #tpu.memory_space<vmem>>, vector<8x32xbf16>
    %c0_3 = arith.constant 0 : index
    %c0_4 = arith.constant 0 : index
    %8 = vector.load %arg9[%c0_3, %c0_4] : memref<8x32xbf16, #tpu.memory_space<vmem>>, vector<8x32xbf16>
    %cst = arith.constant dense<0.000000e+00> : vector<8x8xf32>
    %9 = tpu.matmul %6, %7, %cst {dimension_numbers = #tpu.dot_dimension_numbers<[1], [1], [0], [0], [0, 0, 1, 0], [], []>} : vector<8x32xbf16>, vector<8x32xbf16>, vector<8x8xf32> -> vector<8x8xf32>
    %cst_5 = arith.constant dense<0xFF800000> : vector<8xf32>
    %10 = vector.multi_reduction <maximumf>, %9, %cst_5 [1] : vector<8x8xf32> to vector<8xf32>
    %11 = vector.shape_cast %10 : vector<8xf32> to vector<8x1xf32>
    %12 = vector.broadcast %11 : vector<8x1xf32> to vector<8x8xf32>
    %13 = arith.subf %9, %12 : vector<8x8xf32>
    %14 = math.exp %13 : vector<8x8xf32>
    %cst_6 = arith.constant dense<0.000000e+00> : vector<8xf32>
    %15 = vector.multi_reduction <add>, %14, %cst_6 [1] : vector<8x8xf32> to vector<8xf32>
    %16 = vector.shape_cast %15 : vector<8xf32> to vector<8x1xf32>
    %17 = arith.truncf %14 : vector<8x8xf32> to vector<8x8xbf16>
    %cst_7 = arith.constant dense<0.000000e+00> : vector<8x32xf32>
    %18 = tpu.matmul %17, %8, %cst_7 {dimension_numbers = #tpu.dot_dimension_numbers<[1], [0], [0], [1], [0, 0, 1, 1], [], []>} : vector<8x8xbf16>, vector<8x32xbf16>, vector<8x32xf32> -> vector<8x32xf32>
    %19 = tpu.reciprocal %16 {approx = true} : vector<8x1xf32> -> vector<8x1xf32>
    %20 = vector.broadcast %19 : vector<8x1xf32> to vector<8x32xf32>
    %21 = arith.mulf %18, %20 : vector<8x32xf32>
    %c0_8 = arith.constant 0 : index
    %22 = arith.index_cast %4 : i32 to index
    %c0_9 = arith.constant 0 : index
    %23 = vector.load %arg2[%c0_8, %22, %c0_9] : memref<1x8x32xf32, #tpu.memory_space<vmem>>, vector<1x8x32xf32>
    %24 = vector.shape_cast %23 : vector<1x8x32xf32> to vector<8x32xf32>
    %25 = arith.addf %21, %24 : vector<8x32xf32>
    %cst_10 = arith.constant dense<0.000000e+00> : vector<8xf32>
    %26 = vector.multi_reduction <add>, %25, %cst_10 [1] : vector<8x32xf32> to vector<8xf32>
    %27 = vector.shape_cast %26 : vector<8xf32> to vector<8x1xf32>
    %cst_11 = arith.constant 3.200000e+01 : f32
    %28 = vector.broadcast %cst_11 : f32 to vector<8x1xf32>
    %29 = arith.divf %27, %28 : vector<8x1xf32>
    %30 = vector.broadcast %29 : vector<8x1xf32> to vector<8x32xf32>
    %31 = arith.subf %25, %30 : vector<8x32xf32>
    %32 = arith.mulf %31, %31 : vector<8x32xf32>
    %cst_12 = arith.constant dense<0.000000e+00> : vector<8xf32>
    %33 = vector.multi_reduction <add>, %32, %cst_12 [1] : vector<8x32xf32> to vector<8xf32>
    %34 = vector.shape_cast %33 : vector<8xf32> to vector<8x1xf32>
    %cst_13 = arith.constant 3.200000e+01 : f32
    %35 = vector.broadcast %cst_13 : f32 to vector<8x1xf32>
    %36 = arith.divf %34, %35 : vector<8x1xf32>
    %cst_14 = arith.constant 9.99999974E-6 : f32
    %37 = vector.broadcast %cst_14 : f32 to vector<8x1xf32>
    %38 = arith.addf %36, %37 : vector<8x1xf32>
    %39 = math.rsqrt %38 : vector<8x1xf32>
    %40 = vector.broadcast %39 : vector<8x1xf32> to vector<8x32xf32>
    %41 = arith.mulf %31, %40 : vector<8x32xf32>
    %c0_15 = arith.constant 0 : index
    %c0_16 = arith.constant 0 : index
    %42 = vector.load %arg4[%c0_15, %c0_16] : memref<1x32xf32, #tpu.memory_space<vmem>>, vector<1x32xf32>
    %43 = vector.broadcast %42 : vector<1x32xf32> to vector<8x32xf32>
    %44 = arith.mulf %41, %43 : vector<8x32xf32>
    %c0_17 = arith.constant 0 : index
    %c0_18 = arith.constant 0 : index
    %45 = vector.load %arg5[%c0_17, %c0_18] : memref<1x32xf32, #tpu.memory_space<vmem>>, vector<1x32xf32>
    %46 = vector.broadcast %45 : vector<1x32xf32> to vector<8x32xf32>
    %47 = arith.addf %44, %46 : vector<8x32xf32>
    %c0_19 = arith.constant 0 : index
    %c0_20 = arith.constant 0 : index
    %c0_21 = arith.constant 0 : index
    %48 = vector.load %arg6[%c0_19, %c0_20, %c0_21] : memref<1x8x32xf32, #tpu.memory_space<vmem>>, vector<1x8x32xf32>
    %49 = vector.shape_cast %48 : vector<1x8x32xf32> to vector<8x32xf32>
    %50 = vector.shape_cast %47 : vector<8x32xf32> to vector<1x8x32xf32>
    tpu.vector_store %arg6[%c0_19, %c0_20, %c0_21], %50 {strides = array<i32>} : memref<1x8x32xf32, #tpu.memory_space<vmem>>, vector<1x8x32xf32>,
    return
  }
  func.func @transform_0(%arg0: i32, %arg1: i32) -> (i32, i32, i32) {
    %c0_i32 = arith.constant 0 : i32
    %c0_i32_0 = arith.constant 0 : i32
    %c0_i32_1 = arith.constant 0 : i32
    return %arg0, %c0_i32, %c0_i32_0 : i32, i32, i32
  }
  func.func @transform_1(%arg0: i32, %arg1: i32) -> (i32, i32) {
    %c0_i32 = arith.constant 0 : i32
    %c0_i32_0 = arith.constant 0 : i32
    %c0_i32_1 = arith.constant 0 : i32
    return %c0_i32, %c0_i32_0 : i32, i32
  }
  func.func @transform_2(%arg0: i32, %arg1: i32) -> (i32, i32) {
    %c0_i32 = arith.constant 0 : i32
    %c0_i32_0 = arith.constant 0 : i32
    %c0_i32_1 = arith.constant 0 : i32
    return %c0_i32, %c0_i32_0 : i32, i32
  }
  func.func @transform_3(%arg0: i32, %arg1: i32) -> (i32, i32) {
    %c0_i32 = arith.constant 0 : i32
    %c0_i32_0 = arith.constant 0 : i32
    %c0_i32_1 = arith.constant 0 : i32
    return %c0_i32, %c0_i32_0 : i32, i32
  }
  func.func @transform_4(%arg0: i32, %arg1: i32) -> (i32, i32, i32) {
    %c0_i32 = arith.constant 0 : i32
    %c0_i32_0 = arith.constant 0 : i32
    return %arg0, %arg1, %c0_i32 : i32, i32, i32
  }
}

</mosaic_0001>

<llo_original>
// kernel: tpu_custom_call.1
$region0: #{tpu_custom_call.1}
  #allocation0 [shape = 'u32[]', space=smem, size = 0x4, offset = 0x4, fixed_abs, tag = 'smem constant byte address 0x4 - core index']
  #allocation1 [shape = 'u32[144,128]{1,0:T(1,128)}', space=vmem, size = 0x12000, scoped, tag = 'internal scratch']
  #allocation2 [shape = 'bf16[8,32]{1,0:T(8,128)(2,1)}', space=vmem, size = 0x800, scoped, tag = 'scratch operand']
  #allocation3 [shape = 'bf16[8,32]{1,0:T(8,128)(2,1)}', space=vmem, size = 0x800, scoped, tag = 'scratch operand']
  #allocation4 [shape = 'bf16[8,32]{1,0:T(8,128)(2,1)}', space=vmem, size = 0x800, scoped, tag = 'scratch operand']
  %s0 = inlined_call_operand.hbm [shape: f32[2,8,32], index: 0, kind: input, shape index: {}]
  %s1 = inlined_call_operand.hbm [shape: bf16[32,96], index: 1, kind: input, shape index: {}]
  %s2 = inlined_call_operand.vmem [shape: f32[1,32], index: 2, kind: input, shape index: {}]
  %s3 = inlined_call_operand.vmem [shape: f32[1,32], index: 3, kind: input, shape index: {}]
  %s4 = inlined_call_operand.hbm [shape: f32[2,8,32], index: 4, kind: output, shape index: {}]
  %s5 = sld [smem:[#allocation0]]
  $region61: #{tpu_custom_call.1} parent=0
    _
  %s7 = ssub.s32 1, %s5
  %s8 = scalar_select 0, %s7, %s5
  $region1: #{tpu_custom_call.1} parent=0
    #allocation5 [shape = 'u8[8192]{0}', space=vmem, size = 0x2000, scoped, tag = 'input window, operand 0']
    #allocation6 [shape = 's32[2]{0}', space=sflag, size = 0x8, scoped, tag = 'scoped memory for tpu_custom_call.1']
    #allocation7 [shape = 's32[2]{0}', space=sflag, size = 0x8, scoped, tag = 'scoped memory for tpu_custom_call.1']
    #allocation8 [shape = 'u8[8192]{0}', space=vmem, size = 0x2000, scoped, tag = 'input window, operand 1, single buffered']
    #allocation9 [shape = 's32[1]{0}', space=sflag, size = 0x4, scoped, tag = 'scoped memory for tpu_custom_call.1']
    #allocation10 [shape = 'u8[8192]{0}', space=vmem, size = 0x2000, scoped, tag = 'output window, operand 0']
    %9 = vsyncpa [#allocation6], 0
    %s10 = scalar_lea.sflag [#allocation6], 1
    %11 = vsyncpa %s10, 0
    %12 = vsyncpa [#allocation9], 0
    %13 = vsyncpa [#allocation7], 0
    %s14 = scalar_lea.sflag [#allocation7], 1
    %15 = vsyncpa %s14, 0
    loop: start=0, step=1, limit=4
    $region2: #{tpu_custom_call.1} parent=1 // loop_pre_header
      _
    $region3: #{tpu_custom_call.1} parent=1 // loop_header
      %s17 = sphi 0, %s21
      %p18 = scmp.ge.s32.totalorder %s17, 4
      %s24 = sphi 0, %s36
      %s25 = sphi 0, %s32
      %s26 = sphi 0, %s24
      %s27 = sphi 0, %s25
      %s28 = sphi 0, %s26
      %s29 = sphi 0, %s27
      %s39 = sphi 0, %s41
      %s42 = sphi 0, %s39
      %s43 = sphi 0, %s42
      %s59 = sphi 0, %s43
      %s63 = sphi 0, %s63
      %s65 = sphi 0, %s63
      %s66 = sphi 0, %s65
      %s80 = sphi 0, %s66
      %s84 = sphi 0, %s84
      %s86 = sphi 0, %s84
      %s87 = sphi 0, %s86
      %s101 = sphi 0, %s87
      %s105 = sphi 0, %s105
      %s107 = sphi 0, %s105
      %s108 = sphi 0, %s107
      %s122 = sphi 0, %s108
      %s130 = sphi 0, %s132
      %s133 = sphi 0, %s130
      %s134 = sphi 0, %s133
      %s150 = sphi 0, %s134
    $region4: #{tpu_custom_call.1} parent=1 // loop_header_branch
      %20 = sbr.rel (%p18) target = $region8
    $region5: #{tpu_custom_call.1} parent=1 // loop_body
      %s22 = ssub.s32 %s17, 1
      %s23 = ssub.s32 %s17, 2
      %s30 = sadd.s32 1, %s25
      %p31 = scmp.ge.s32.totalorder %s30, 1
      %s32 = scalar_select %p31, 0, %s30
      %s33 = sadd.s32 1, %s24
      %s34 = scalar_select %p31, %s33, %s24
      %p35 = scmp.ge.s32.totalorder %s34, 2
      %s36 = scalar_select %p35, 0, %s34
      %s37 = ssub.s32 %s24, %s36
      %p38 = scmp.eq.s32.totalorder %s37, 0
      %s40 = sadd.s32 %s39, 1
      %s41 = scalar_select %p38, %s39, %s40
      %p44 = pneg %p38
      %p45 = scmp.eq.s32.totalorder %s17, 1
      %p46 = por %p44, %p45
      %p47 = scmp.ne.s32.totalorder %s39, %s42
      %p48 = scmp.eq.s32.totalorder %s17, 0
      %p49 = por %p47, %p48
      %p50 = scmp.ne.s32.totalorder %s39, %s42
      %p51 = scmp.eq.s32.totalorder %s22, 1
      %p52 = por %p50, %p51
      %p53 = scmp.ne.s32.totalorder %s42, %s43
      %p54 = scmp.eq.s32.totalorder %s22, 0
      %p55 = por %p53, %p54
      %p56 = scmp.ne.s32.totalorder %s42, %s43
      %p57 = scmp.eq.s32.totalorder %s23, 1
      %p58 = por %p56, %p57
      %p60 = scmp.ne.s32.totalorder %s43, %s59
      %p61 = scmp.eq.s32.totalorder %s23, 0
      %p62 = por %p60, %p61
      %s64 = sadd.s32 %s63, 1
      %p67 = scmp.eq.s32.totalorder %s17, 1
      %p68 = scmp.ne.s32.totalorder %s63, %s65
      %p69 = scmp.eq.s32.totalorder %s17, 0
      %p70 = por %p68, %p69
      %p71 = scmp.ne.s32.totalorder %s63, %s65
      %p72 = scmp.eq.s32.totalorder %s22, 1
      %p73 = por %p71, %p72
      %p74 = scmp.ne.s32.totalorder %s65, %s66
      %p75 = scmp.eq.s32.totalorder %s22, 0
      %p76 = por %p74, %p75
      %p77 = scmp.ne.s32.totalorder %s65, %s66
      %p78 = scmp.eq.s32.totalorder %s23, 1
      %p79 = por %p77, %p78
      %p81 = scmp.ne.s32.totalorder %s66, %s80
      %p82 = scmp.eq.s32.totalorder %s23, 0
      %p83 = por %p81, %p82
      %s85 = sadd.s32 %s84, 1
      %p88 = scmp.eq.s32.totalorder %s17, 1
      %p89 = scmp.ne.s32.totalorder %s84, %s86
      %p90 = scmp.eq.s32.totalorder %s17, 0
      %p91 = por %p89, %p90
      %p92 = scmp.ne.s32.totalorder %s84, %s86
      %p93 = scmp.eq.s32.totalorder %s22, 1
      %p94 = por %p92, %p93
      %p95 = scmp.ne.s32.totalorder %s86, %s87
      %p96 = scmp.eq.s32.totalorder %s22, 0
      %p97 = por %p95, %p96
      %p98 = scmp.ne.s32.totalorder %s86, %s87
      %p99 = scmp.eq.s32.totalorder %s23, 1
      %p100 = por %p98, %p99
      %p102 = scmp.ne.s32.totalorder %s87, %s101
      %p103 = scmp.eq.s32.totalorder %s23, 0
      %p104 = por %p102, %p103
      %s106 = sadd.s32 %s105, 1
      %p109 = scmp.eq.s32.totalorder %s17, 1
      %p110 = scmp.ne.s32.totalorder %s105, %s107
      %p111 = scmp.eq.s32.totalorder %s17, 0
      %p112 = por %p110, %p111
      %p113 = scmp.ne.s32.totalorder %s105, %s107
      %p114 = scmp.eq.s32.totalorder %s22, 1
      %p115 = por %p113, %p114
      %p116 = scmp.ne.s32.totalorder %s107, %s108
      %p117 = scmp.eq.s32.totalorder %s22, 0
      %p118 = por %p116, %p117
      %p119 = scmp.ne.s32.totalorder %s107, %s108
      %p120 = scmp.eq.s32.totalorder %s23, 1
      %p121 = por %p119, %p120
      %p123 = scmp.ne.s32.totalorder %s108, %s122
      %p124 = scmp.eq.s32.totalorder %s23, 0
      %p125 = por %p123, %p124
      %s126 = ssub.s32 %s24, %s36
      %s127 = ssub.s32 %s25, %s32
      %s128 = sor.u32 %s126, %s127
      %p129 = scmp.eq.s32.totalorder %s128, 0
      %s131 = sadd.s32 %s130, 1
      %s132 = scalar_select %p129, %s130, %s131
      %p135 = pneg %p129
      %p136 = scmp.eq.s32.totalorder %s17, 1
      %p137 = por %p135, %p136
      %p138 = scmp.ne.s32.totalorder %s130, %s133
      %p139 = scmp.eq.s32.totalorder %s17, 0
      %p140 = por %p138, %p139
      %p141 = scmp.ne.s32.totalorder %s130, %s133
      %p142 = scmp.eq.s32.totalorder %s22, 1
      %p143 = por %p141, %p142
      %p144 = scmp.ne.s32.totalorder %s133, %s134
      %p145 = scmp.eq.s32.totalorder %s22, 0
      %p146 = por %p144, %p145
      %p147 = scmp.ne.s32.totalorder %s133, %s134
      %p148 = scmp.eq.s32.totalorder %s23, 1
      %p149 = por %p147, %p148
      %p151 = scmp.ne.s32.totalorder %s134, %s150
      %p152 = scmp.eq.s32.totalorder %s23, 0
      %p153 = por %p151, %p152
      %p154 = scmp.le.s32.totalorder 1, %s17
      %p155 = scmp.lt.s32.totalorder %s17, 3
      %p156 = pnand %p154, %p155
      %p157 = pneg %p156
      // Predicated region
      $region9: #{tpu_custom_call.1} parent=5 // pred_check
        _
      $region10: #{tpu_custom_call.1} parent=5 // pred_check_branch
        %159 = sbr.rel (%p156) target = $region12
      $region11: #{tpu_custom_call.1} parent=5 // pred_region
        %s160 = ssub.s32 %s17, 1
        // Predicated region
        $region13: #{tpu_custom_call.1} parent=11 // pred_check
          %p161 = pneg %p76
        $region14: #{tpu_custom_call.1} parent=11 // pred_check_branch
          %163 = sbr.rel (%p161) target = $region16
        $region15: #{tpu_custom_call.1} parent=11 // pred_region
          %s165 = ssub.s32 256, 256
          %166 = vsyncadd [#allocation9], %s165
          %s167 = sshll.u32 [#allocation8], 4
          %s168 = int_to_ptr.vmem [resolvable:$true] %s167
          %173 = dma.hbm_to_vmem [thread:$0]  %s1, 256, %s168, [#allocation9], 64, 64, 4
        $region16: #{tpu_custom_call.1} parent=11 // pred_fallthru
          _
        // Predicated region
        $region17: #{tpu_custom_call.1} parent=11 // pred_check
          %p174 = pneg %p97
        $region18: #{tpu_custom_call.1} parent=11 // pred_check_branch
          %176 = sbr.rel (%p174) target = $region20
        $region19: #{tpu_custom_call.1} parent=11 // pred_region
          _
        $region20: #{tpu_custom_call.1} parent=11 // pred_fallthru
          _
        // Predicated region
        $region21: #{tpu_custom_call.1} parent=11 // pred_check
          %p177 = pneg %p118
        $region22: #{tpu_custom_call.1} parent=11 // pred_check_branch
          %179 = sbr.rel (%p177) target = $region24
        $region23: #{tpu_custom_call.1} parent=11 // pred_region
          _
        $region24: #{tpu_custom_call.1} parent=11 // pred_fallthru
          _
      $region12: #{tpu_custom_call.1} parent=5 // pred_fallthru
        _
      %p180 = scmp.lt.s32.totalorder %s17, 2
      // Predicated region
      $region25: #{tpu_custom_call.1} parent=5 // pred_check
        %p181 = pneg %p180
      $region26: #{tpu_custom_call.1} parent=5 // pred_check_branch
        %183 = sbr.rel (%p181) target = $region28
      $region27: #{tpu_custom_call.1} parent=5 // pred_region
        // Predicated region
        $region29: #{tpu_custom_call.1} parent=27 // pred_check
          %p184 = pneg %p49
        $region30: #{tpu_custom_call.1} parent=27 // pred_check_branch
          %186 = sbr.rel (%p184) target = $region32
        $region31: #{tpu_custom_call.1} parent=27 // pred_region
          %s187 = sand.u32 %s39, 1
          %s188 = scalar_lea.sflag [#allocation6], %s187
          %s189 = sand.u32 %s39, 1
          %s190 = smul.addr %s189, 8
          %s191 = scalar_lea.vmem [#allocation5], %s190
          %s193 = ssub.s32 128, 128
          %194 = vsyncadd %s188, %s193
          %s195 = smul.addr %s24, 128
          %s196 = scalar_lea.hbm %s0, %s195
          %s198 = sshll.u32 %s191, 4
          %s199 = int_to_ptr.vmem [resolvable:$true] %s198
          %201 = dma.hbm_to_vmem [thread:$0]  %s196, 128, %s199, %s188
        $region32: #{tpu_custom_call.1} parent=27 // pred_fallthru
          _
      $region28: #{tpu_custom_call.1} parent=5 // pred_fallthru
        _
      %p202 = scmp.le.s32.totalorder 1, %s17
      %p203 = scmp.lt.s32.totalorder %s17, 3
      %p204 = pnand %p202, %p203
      %p205 = pneg %p204
      // Predicated region
      $region33: #{tpu_custom_call.1} parent=5 // pred_check
        _
      $region34: #{tpu_custom_call.1} parent=5 // pred_check_branch
        %207 = sbr.rel (%p204) target = $region36
      $region35: #{tpu_custom_call.1} parent=5 // pred_region
        %s208 = ssub.s32 %s17, 1
        %s209 = sand.u32 %s42, 1
        %s210 = scalar_lea.sflag [#allocation6], %s209
        %s211 = sand.u32 %s42, 1
        %s212 = smul.addr %s211, 8
        %s213 = scalar_lea.vmem [#allocation5], %s212
        // Predicated region
        $region37: #{tpu_custom_call.1} parent=35 // pred_check
          %p214 = pneg %p55
        $region38: #{tpu_custom_call.1} parent=35 // pred_check_branch
          %216 = sbr.rel (%p214) target = $region40
        $region39: #{tpu_custom_call.1} parent=35 // pred_region
          %217 = dma.done %s210, 128
        $region40: #{tpu_custom_call.1} parent=35 // pred_fallthru
          _
        // Predicated region
        $region41: #{tpu_custom_call.1} parent=35 // pred_check
          %p218 = pneg %p76
        $region42: #{tpu_custom_call.1} parent=35 // pred_check_branch
          %220 = sbr.rel (%p218) target = $region44
        $region43: #{tpu_custom_call.1} parent=35 // pred_region
          %221 = dma.done [#allocation9], 256
        $region44: #{tpu_custom_call.1} parent=35 // pred_fallthru
          _
        %s222 = sand.u32 %s42, 1
        %s223 = scalar_lea.sflag [#allocation6], %s222
        %s224 = sand.u32 %s42, 1
        %s225 = smul.addr %s224, 8
        %s226 = scalar_lea.vmem [#allocation5], %s225
        %p227 = pneg %p55
        %p228 = pneg %p52
        %p229 = pneg %p76
        %p230 = pneg %p73
        %p231 = pneg %p97
        %p232 = pneg %p94
        %p233 = pneg %p118
        %p234 = pneg %p115
        %p235 = pneg %p146
        %p236 = pneg %p143
        %s237 = sand.u32 %s133, 1
        %s238 = scalar_lea.sflag [#allocation7], %s237
        %s239 = sand.u32 %s133, 1
        %s240 = smul.addr %s239, 8
        %s241 = scalar_lea.vmem [#allocation10], %s240
        %p243 = scmp.eq.s32.totalorder %s27, 0
        // Predicated region
        $region45: #{tpu_custom_call.1} parent=35 // pred_check
          %p244 = pneg %p243
        $region46: #{tpu_custom_call.1} parent=35 // pred_check_branch
          %246 = sbr.rel (%p244) target = $region48
        $region47: #{tpu_custom_call.1} parent=35 // pred_region
          %v247 = vld [vmem:[%s213] sm:$0xff]
          %v248 = vpack.c.bf16 %v247, %v247
          %v249 = vld [vmem:[#allocation8] sm:$0xf]
          %v250 = vld [vmem:[#allocation8 + $0x4] sm:$0xf]
          %v251 = vld [vmem:[#allocation8 + $0x8] sm:$0xf]
          %v252 = vld [vmem:[#allocation8 + $0xc] sm:$0xf]
          %v257 = vunpack.c.l.b16 %v249
          %v258 = vunpack.c.l.b16 %v250
          %v259 = vunpack.c.l.b16 %v251
          %v260 = vunpack.c.l.b16 %v252
          %v261 = vpack.c.b16 %v258, %v257
          %v262 = vpack.c.b16 %v260, %v259
          %vm265 = vcmask 261120
          %v267 = vsel %vm265, %v248, 0
          %269 = vmatprep.subr.bf16.mxu0 0
          %270 = vmatpush1.bf16.msra.mxu0 %v261
          %271 = vmatprep.subr.bf16.mxu0 0
          %272 = vmatpush1.bf16.msra.mxu0 %v262
          %273 = vmatprep.subr.bf16.mxu0 0
          %274 = vmatpush1.bf16.msra.mxu0 0
          %275 = vmatprep.subr.bf16.mxu0 0
          %276 = vmatpush1.bf16.msra.mxu0 0
          %277 = vmatprep.subr.bf16.mxu0 0
          %278 = vmatpush1.bf16.msra.mxu0 0
          %279 = vmatprep.subr.bf16.mxu0 0
          %280 = vmatpush1.bf16.msra.mxu0 0
          %281 = vmatprep.subr.bf16.mxu0 0
          %282 = vmatpush1.bf16.msra.mxu0 0
          %283 = vmatprep.subr.bf16.mxu0 0
          %284 = vmatpush1.bf16.msra.mxu0 0
          %285 = vmatprep.subr.bf16.mxu0 0
          %286 = vmatpush1.bf16.msra.mxu0 0
          %287 = vmatprep.subr.bf16.mxu0 0
          %288 = vmatpush1.bf16.msra.mxu0 0
          %289 = vmatprep.subr.bf16.mxu0 0
          %290 = vmatpush1.bf16.msra.mxu0 0
          %291 = vmatprep.subr.bf16.mxu0 0
          %292 = vmatpush1.bf16.msra.mxu0 0
          %293 = vmatprep.subr.bf16.mxu0 0
          %294 = vmatpush1.bf16.msra.mxu0 0
          %295 = vmatprep.subr.bf16.mxu0 0
          %296 = vmatpush1.bf16.msra.mxu0 0
          %297 = vmatprep.subr.bf16.mxu0 0
          %298 = vmatpush1.bf16.msra.mxu0 0
          %299 = vmatprep.subr.bf16.mxu0 0
          %300 = vmatpush1.bf16.msra.mxu0 0
          %301 = vmatprep.mubr.bf16.mxu0 0
          %302 = vmatmul.mubr.bf16.gmra.mrb[0].mxu0 %v267
          %v303 = vpop.f32.mrb[0].mxu0
          %v304 = vadd.f32 0.0, %v303
          %v305 = vpop.f32.mrb[0].mxu0
          %v306 = vpop.f32.mrb[0].mxu0
          %v307 = vpop.f32.mrb[0].mxu0
          %308 = vdwg.mxu0
          %v309 = vpack.c.bf16 %v304, %v304
          %vm310 = vcmask 257024
          %311 = vst.msk [vmem:[#allocation2] sm:$0xf] %vm310, %v309
          %v313 = vunpack.c.l.b16 %v309
          %v314 = vpack.c.b16 %v313, %v313
          %315 = vrot.lane.b32.xlu0 %v314, 96
          %v316 = vpop.permute.xlu0 %315
          %318 = vst.msk [vmem:[#allocation3] sm:$0xf] %vm310, %v316
          %319 = vrot.lane.b32.xlu0 %v314, 64
          %v320 = vpop.permute.xlu0 %319
          %322 = vst.msk [vmem:[#allocation4] sm:$0xf] %vm310, %v320
        $region48: #{tpu_custom_call.1} parent=35 // pred_fallthru
          _
        %s323 = smul.u32 %s27, 8
        %s324 = sshra.s32 %s323, 3
        %s325 = sand.u32 %s323, 7
        %s326 = smul.addr %s324, 4
        %s327 = scalar_lea.vmem [#allocation2], %s326
        %v328 = vld [vmem:[%s327] sm:$0xf]
        %v329 = vld [vmem:[#allocation3] sm:$0xf]
        %v330 = vld [vmem:[#allocation4] sm:$0xf]
        %vm331 = vcmask 261120
        %v333 = vsel %vm331, %v328, 0
        %v336 = vsel %vm331, %v329, 0
        %338 = vmatprep.subr.bf16.mxu0 0
        %339 = vmatpush1.bf16.xpose.msra.mxu0 %v336
        %340 = vmatprep.subr.bf16.mxu0 0
        %341 = vmatpush1.bf16.xpose.msra.mxu0 0
        %342 = vmatprep.subr.bf16.mxu0 0
        %343 = vmatpush1.bf16.xpose.msra.mxu0 0
        %344 = vmatprep.subr.bf16.mxu0 0
        %345 = vmatpush1.bf16.xpose.msra.mxu0 0
        %346 = vmatprep.subr.bf16.mxu0 0
        %347 = vmatpush1.bf16.xpose.msra.mxu0 0
        %348 = vmatprep.subr.bf16.mxu0 0
        %349 = vmatpush1.bf16.xpose.msra.mxu0 0
        %350 = vmatprep.subr.bf16.mxu0 0
        %351 = vmatpush1.bf16.xpose.msra.mxu0 0
        %352 = vmatprep.subr.bf16.mxu0 0
        %353 = vmatpush1.bf16.xpose.msra.mxu0 0
        %354 = vmatprep.subr.bf16.mxu0 0
        %355 = vmatpush1.bf16.xpose.msra.mxu0 0
        %356 = vmatprep.subr.bf16.mxu0 0
        %357 = vmatpush1.bf16.xpose.msra.mxu0 0
        %358 = vmatprep.subr.bf16.mxu0 0
        %359 = vmatpush1.bf16.xpose.msra.mxu0 0
        %360 = vmatprep.subr.bf16.mxu0 0
        %361 = vmatpush1.bf16.xpose.msra.mxu0 0
        %362 = vmatprep.subr.bf16.mxu0 0
        %363 = vmatpush1.bf16.xpose.msra.mxu0 0
        %364 = vmatprep.subr.bf16.mxu0 0
        %365 = vmatpush1.bf16.xpose.msra.mxu0 0
        %366 = vmatprep.subr.bf16.mxu0 0
        %367 = vmatpush1.bf16.xpose.msra.mxu0 0
        %368 = vmatprep.subr.bf16.mxu0 0
        %369 = vmatpush1.bf16.xpose.msra.mxu0 0
        %370 = vmatprep.mubr.bf16.mxu0 0
        %371 = vmatmul.mubr.bf16.gmra.mrb[0].mxu0 %v333
        %v372 = vpop.f32.mrb[0].mxu0
        %v373 = vadd.f32 0.0, %v372
        %v374 = vpop.f32.mrb[0].mxu0
        %v375 = vpop.f32.mrb[0].mxu0
        %v376 = vpop.f32.mrb[0].mxu0
        %377 = vdwg.mxu0
        %vm378 = vcmask 64512
        %v379 = vsel %vm378, %v373, -inf
        %380 = vmax.xlane.f32.xlu0 %v379
        %v381 = vpop.xlane.xlu0 %380
        %v382 = vsub.f32 %v373, %v381
        %v383 = vmul.f32 %v382, 1.442695
        %v384 = vpow.pop %v383
        %v385 = vsel %vm378, %v384, 0.0
        %386 = vadd.xlane.f32.xlu0 %v385
        %v387 = vpop.xlane.xlu0 %386
        %v388 = vpack.c.bf16 %v384, %v384
        %v390 = vsel %vm378, %v388, 0
        %vm392 = vcmask 1043456
        %v394 = vsel %vm392, %v330, 0
        %396 = vmatprep.subr.bf16.mxu0 0
        %397 = vmatpush1.bf16.msra.mxu0 %v394
        %398 = vmatprep.subr.bf16.mxu0 0
        %399 = vmatpush1.bf16.msra.mxu0 0
        %400 = vmatprep.subr.bf16.mxu0 0
        %401 = vmatpush1.bf16.msra.mxu0 0
        %402 = vmatprep.subr.bf16.mxu0 0
        %403 = vmatpush1.bf16.msra.mxu0 0
        %404 = vmatprep.subr.bf16.mxu0 0
        %405 = vmatpush1.bf16.msra.mxu0 0
        %406 = vmatprep.subr.bf16.mxu0 0
        %407 = vmatpush1.bf16.msra.mxu0 0
        %408 = vmatprep.subr.bf16.mxu0 0
        %409 = vmatpush1.bf16.msra.mxu0 0
        %410 = vmatprep.subr.bf16.mxu0 0
        %411 = vmatpush1.bf16.msra.mxu0 0
        %412 = vmatprep.subr.bf16.mxu0 0
        %413 = vmatpush1.bf16.msra.mxu0 0
        %414 = vmatprep.subr.bf16.mxu0 0
        %415 = vmatpush1.bf16.msra.mxu0 0
        %416 = vmatprep.subr.bf16.mxu0 0
        %417 = vmatpush1.bf16.msra.mxu0 0
        %418 = vmatprep.subr.bf16.mxu0 0
        %419 = vmatpush1.bf16.msra.mxu0 0
        %420 = vmatprep.subr.bf16.mxu0 0
        %421 = vmatpush1.bf16.msra.mxu0 0
        %422 = vmatprep.subr.bf16.mxu0 0
        %423 = vmatpush1.bf16.msra.mxu0 0
        %424 = vmatprep.subr.bf16.mxu0 0
        %425 = vmatpush1.bf16.msra.mxu0 0
        %426 = vmatprep.subr.bf16.mxu0 0
        %427 = vmatpush1.bf16.msra.mxu0 0
        %428 = vmatprep.mubr.bf16.mxu0 0
        %429 = vmatmul.mubr.bf16.gmra.mrb[0].mxu0 %v390
        %v430 = vpop.f32.mrb[0].mxu0
        %v431 = vadd.f32 0.0, %v430
        %v432 = vpop.f32.mrb[0].mxu0
        %v433 = vpop.f32.mrb[0].mxu0
        %v434 = vpop.f32.mrb[0].mxu0
        %435 = vdwg.mxu0
        %v436 = vrcp.pop %v387
        %v437 = vmul.f32 %v431, %v436
        %s438 = scalar_lea.vmem %s213, %s323 [#allocation5]
        %v439 = vld [vmem:[%s438] sm:$0xff]
        %v440 = vadd.f32 %v437, %v439
        %v441 = vsel %vm331, %v440, 0.0
        %442 = vadd.xlane.f32.xlu0 %v441
        %v443 = vpop.xlane.xlu0 %442
        %v444 = vrcp.pop 32.0
        %v445 = vmul.f32 %v443, %v444
        %v446 = vsub.f32 %v440, %v445
        %v447 = vmul.f32 %v446, %v446
        %v448 = vsel %vm331, %v447, 0.0
        %449 = vadd.xlane.f32.xlu0 %v448
        %v450 = vpop.xlane.xlu0 %449
        %v451 = vmul.f32 %v450, %v444
        %v452 = vadd.f32 %v451, 1e-05
        %v453 = vrsqrt.pop %v452
        %v454 = vmul.f32 %v446, %v453
        %v455 = vld [vmem:[%s2] sm:$0x1]
        %v457 = vlaneseq
        %v458 = vshrl.u32 %v457, 7
        %v459 = vsub.s32 0, %v458
        %v460 = vrot.slane %v455, %v459
        %v462 = vmul.f32 %v454, %v460
        %v463 = vld [vmem:[%s3] sm:$0x1]
        %v465 = vlaneseq
        %v466 = vshrl.u32 %v465, 7
        %v467 = vsub.s32 0, %v466
        %v468 = vrot.slane %v463, %v467
        %v470 = vadd.f32 %v462, %v468
        %471 = vst.msk [vmem:[%s241] sm:$0xff] %vm331, %v470
        %s472 = sand.u32 %s133, 1
        %s473 = scalar_lea.sflag [#allocation7], %s472
        %s474 = sand.u32 %s133, 1
        %s475 = smul.addr %s474, 8
        %s476 = scalar_lea.vmem [#allocation10], %s475
        // Predicated region
        $region49: #{tpu_custom_call.1} parent=35 // pred_check
          %p477 = pneg %p143
        $region50: #{tpu_custom_call.1} parent=35 // pred_check_branch
          %479 = sbr.rel (%p477) target = $region52
        $region51: #{tpu_custom_call.1} parent=35 // pred_region
          %s481 = ssub.s32 128, 128
          %482 = vsyncadd %s473, %s481
          %s483 = sadd.s32 %s27, %s26
          %s484 = smul.addr %s483, 128
          %s485 = scalar_lea.hbm %s4, %s484
          %s487 = sshll.u32 %s476, 4
          %s488 = int_to_ptr.vmem [resolvable:$true] %s487
          %490 = dma.vmem_to_hbm [thread:$0]  %s488, 128, %s485, %s473
        $region52: #{tpu_custom_call.1} parent=35 // pred_fallthru
          _
      $region36: #{tpu_custom_call.1} parent=5 // pred_fallthru
        _
      %p491 = scmp.le.s32.totalorder 2, %s17
      // Predicated region
      $region53: #{tpu_custom_call.1} parent=5 // pred_check
        %p492 = pneg %p491
      $region54: #{tpu_custom_call.1} parent=5 // pred_check_branch
        %494 = sbr.rel (%p492) target = $region56
      $region55: #{tpu_custom_call.1} parent=5 // pred_region
        %s495 = ssub.s32 %s17, 2
        // Predicated region
        $region57: #{tpu_custom_call.1} parent=55 // pred_check
          %p496 = pneg %p149
        $region58: #{tpu_custom_call.1} parent=55 // pred_check_branch
          %498 = sbr.rel (%p496) target = $region60
        $region59: #{tpu_custom_call.1} parent=55 // pred_region
          %s499 = sand.u32 %s134, 1
          %s500 = scalar_lea.sflag [#allocation7], %s499
          %s501 = sand.u32 %s134, 1
          %s502 = smul.addr %s501, 8
          %s503 = scalar_lea.vmem [#allocation10], %s502
          %504 = dma.done %s500, 128
        $region60: #{tpu_custom_call.1} parent=55 // pred_fallthru
          _
      $region56: #{tpu_custom_call.1} parent=5 // pred_fallthru
        _
    $region6: #{tpu_custom_call.1} parent=1 // loop_footer
      %s21 = sadd.s32 1, %s17
    $region7: #{tpu_custom_call.1} parent=1 // loop_footer_branch
      %16 = sbr.rel target = $region3
    $region8: #{tpu_custom_call.1} parent=1 // loop_exit
      _
    %505 = vsyncpa [#allocation6], 1
    %s506 = scalar_lea.sflag [#allocation6], 1
    %507 = vsyncpa %s506, 1
    %508 = vsyncpa [#allocation9], 1
    %509 = vsyncpa [#allocation7], 1
    %s510 = scalar_lea.sflag [#allocation7], 1
    %511 = vsyncpa %s510, 1

</llo_original>
